<compile_context>
chip_gen: v6e
topology: v6e:2x2x1
jax: 0.10.0
libtpu: 0.0.40
codegen_flags: <defaults>
</compile_context>

<pallas_src>
import math
import numpy as np
import jax
import jax.numpy as jnp
from jax.experimental import pallas as pl
from jax.experimental.pallas import tpu as pltpu


# -----------------------------------------------------------------------------
# Kernel: out = x + row_pe (broadcast over j) + col_pe (broadcast over i)
# Block shapes:
#   x_ref   : (1, TL, TJ, RD)
#   row_ref : (1, TL, RD)      zero-padded row pe, lane-repeated R x
#   col_ref : (1, TJ, RD)      zero-padded col pe, regrouped to lane-dense
#   out_ref : (1, TL, TJ, RD)
# -----------------------------------------------------------------------------
def _pe2d_kernel(x_ref, row_ref, col_ref, out_ref):
    x = x_ref[0]                # (TL, TJ, RD)
    row = row_ref[0]            # (TL, RD)
    col = col_ref[0]            # (TJ, RD)
    out_ref[0] = x + row[:, None, :] + col[None, :, :]


# -----------------------------------------------------------------------------
# Tiling helpers
# -----------------------------------------------------------------------------
def _min_sublane(dtype):
    """Minimum sublane multiple for dense packed tiles (f32->8, bf16->16, ...)."""
    return 8 * max(1, 4 // np.dtype(dtype).itemsize)


def _tpu_vmem_bytes():
    """Physical per-core VMEM, with conservative fallback (v7x-sized)."""
    try:
        return int(pltpu.get_tpu_info().vmem_capacity_bytes)
    except Exception:
        pass
    try:
        kind = jax.devices()[0].device_kind.lower()
        if any(t in kind for t in ("v5 lite", "v5e", "v5litepod", "v6", "trillium")):
            return 128 << 20
    except Exception:
        pass
    return 64 << 20


def _choose_lane_repeat(L, dim, min_sub):
    """Smallest R dividing L with (R*dim) % 128 == 0 (prefer dense sublanes)."""
    if dim % 128 == 0:
        return 1
    cands = [r for r in range(1, L + 1) if L % r == 0 and (r * dim) % 128 == 0]
    if not cands:
        return 1
    pref = [r for r in cands if (L // r) % min_sub == 0]
    return min(pref) if pref else min(cands)


def _footprint_bytes(tl, tj, RD, itemsize):
    """Pipelined VMEM footprint: 2x(in) + 2x(out) + 2x(row pe) + 2x(col pe)."""
    return (4 * tl * tj + 2 * tl + 2 * tj) * RD * itemsize


def _choose_tiles(L, Lr, RD, itemsize, min_sub, budget):
    """Pick (TL, TJ): largest legal tiles whose pipelined footprint fits budget.

    Prefer a full-j block (TJ = Lr) and tile rows; only shrink TJ when even a
    minimal row tile would blow the budget (large L*dim, e.g. on v7x).
    """
    def legal(full):
        return [t for t in range(1, full + 1)
                if full % t == 0 and (t % min_sub == 0 or t == full)]

    tl_cands, tj_cands = legal(L), legal(Lr)
    for tj in sorted(tj_cands, reverse=True):
        fits = [tl for tl in tl_cands
                if _footprint_bytes(tl, tj, RD, itemsize) <= budget]
        if fits:
            return max(fits), tj
    # No combination fits the budget: fall back to the smallest legal block.
    return min(tl_cands), min(tj_cands)


# -----------------------------------------------------------------------------
# PE table (same values the torch module builds in __init__, shape (max_len, dim//2))
# -----------------------------------------------------------------------------
def make_pos_enc(dim, max_len):
    dh = dim // 2
    denom = jnp.exp(math.log(10000.0) * jnp.arange(0, dh, 2, dtype=jnp.float32) / dh)
    pos = jnp.arange(max_len, dtype=jnp.float32)[:, None]
    ang = pos / denom[None, :]
    pe = jnp.zeros((max_len, dh), jnp.float32)
    pe = pe.at[:, 0::2].set(jnp.sin(ang))
    pe = pe.at[:, 1::2].set(jnp.cos(ang))
    return pe


# -----------------------------------------------------------------------------
# Wrapper
# -----------------------------------------------------------------------------
def sinusoidal_positional_encoding_2d(x, aa_idx, pos_enc):
    """x: (B, L, L, dim), aa_idx: (B, L) int32, pos_enc: (max_len, dim//2)."""
    B, L, L2, dim = x.shape
    assert L2 == L, "x must be (B, L, L, dim)"
    dh = pos_enc.shape[1]
    assert dim == 2 * dh, "dim must be 2 * pos_enc feature width"

    # --- tiny wrapper-side plumbing (gather + zero-pad halves) --------------
    # NOTE: for sub-f32 x this rounds the PE table to x.dtype before the add
    # (differs from torch's f32-promote-then-add by <1 ulp of x.dtype).
    pe_half = jnp.take(pos_enc, aa_idx, axis=0).astype(x.dtype)     # (B, L, dh)
    zeros = jnp.zeros_like(pe_half)
    pe_row = jnp.concatenate([pe_half, zeros], axis=-1)             # (B, L, dim)
    pe_col = jnp.concatenate([zeros, pe_half], axis=-1)             # (B, L, dim)

    itemsize = np.dtype(x.dtype).itemsize
    min_sub = _min_sublane(x.dtype)

    # --- lane-dense regrouping of the trailing (L, dim) dims -----------------
    R = _choose_lane_repeat(L, dim, min_sub)
    Lr, RD = L // R, R * dim
    x_rs = x.reshape(B, L, Lr, RD)                                  # free reshape
    pe_row_rep = jnp.tile(pe_row, (1, 1, R))                        # (B, L, RD)  small
    pe_col_rs = pe_col.reshape(B, Lr, RD)                           # (B, Lr, RD) small

    # --- tile sizes: footprint-aware, per-generation budgets -----------------
    phys_vmem = _tpu_vmem_bytes()
    budget = max(8 << 20, (phys_vmem * 3) // 8)          # ~48 MiB v5e/v6e, ~24 MiB v7x
    TL, TJ = _choose_tiles(L, Lr, RD, itemsize, min_sub, budget)

    fp = _footprint_bytes(TL, TJ, RD, itemsize)
    vmem_limit = min(phys_vmem - (8 << 20),
                     max((phys_vmem * 3) // 4, fp + (4 << 20)))

    grid = (B, L // TL, Lr // TJ)
    out = pl.pallas_call(
        _pe2d_kernel,
        out_shape=jax.ShapeDtypeStruct((B, L, Lr, RD), x.dtype),
        grid_spec=pltpu.PrefetchScalarGridSpec(
            num_scalar_prefetch=0,
            grid=grid,
            in_specs=[
                pl.BlockSpec((1, TL, TJ, RD), lambda b, i, j: (b, i, j, 0)),
                pl.BlockSpec((1, TL, RD), lambda b, i, j: (b, i, 0)),
                pl.BlockSpec((1, TJ, RD), lambda b, i, j: (b, j, 0)),
            ],
            out_specs=pl.BlockSpec((1, TL, TJ, RD), lambda b, i, j: (b, i, j, 0)),
        ),
        compiler_params=pltpu.CompilerParams(
            dimension_semantics=("parallel", "parallel", "parallel"),
            vmem_limit_bytes=int(vmem_limit)),
        input_output_aliases={0: 0},          # out is effectively x += pe
    )(x_rs, pe_row_rep, pe_col_rs)

    return out.reshape(B, L, L, dim)


# -----------------------------------------------------------------------------
# Pure-JAX reference (mirrors the torch forward exactly).
# -----------------------------------------------------------------------------
def reference(x, aa_idx, pos_enc):
    B, L, _, dim = x.shape
    dh = dim // 2
    pe_half = pos_enc[aa_idx]                                        # (B, L, dh)
    pe_rowwise = jnp.broadcast_to(pe_half[:, :, None, :], (B, L, L, dh))
    pe_colwise = jnp.broadcast_to(pe_half[:, None, :, :], (B, L, L, dh))
    return x + jnp.concatenate([pe_rowwise, pe_colwise], axis=-1)


if __name__ == "__main__":
    B, L, dim, max_len = 2, 16, 32, 64

    key = jax.random.PRNGKey(0)
    kx, ki = jax.random.split(key)
    x = jax.random.normal(kx, (B, L, L, dim), jnp.float32)
    aa_idx = jax.random.randint(ki, (B, L), 0, max_len, dtype=jnp.int32)
    pos_enc = make_pos_enc(dim, max_len)

    out = sinusoidal_positional_encoding_2d(x, aa_idx, pos_enc)
    out = jax.block_until_ready(out)

    ref = reference(x, aa_idx, pos_enc)
    assert out.shape == (B, L, L, dim)
    assert bool(jnp.all(jnp.isfinite(out)))
    assert np.allclose(np.asarray(out), np.asarray(ref), atol=1e-6, rtol=1e-6)
    print("KERNEL_OK")
</pallas_src>

<mosaic_0001>
module attributes {stable_mosaic.version = 11 : i64} {
  func.func @_pe2d_kernel(%arg0: i32, %arg1: i32, %arg2: i32, %arg3: memref<1x16x4x128xf32, #tpu.memory_space<vmem>>, %arg4: memref<1x16x128xf32, #tpu.memory_space<vmem>>, %arg5: memref<1x4x128xf32, #tpu.memory_space<vmem>>, %arg6: memref<1x16x4x128xf32, #tpu.memory_space<vmem>>) attributes {dimension_semantics = [#tpu.dimension_semantics<parallel>, #tpu.dimension_semantics<parallel>, #tpu.dimension_semantics<parallel>], iteration_bounds = array<i64: 2, 1, 1>, scalar_prefetch = 0 : i64, scratch_operands = 0 : i64, tpu.core_type = #tpu.core_type<tc>, window_params = [{transform_indices = @transform_0, window_bounds = array<i64: 1, 16, 4, 128>}, {transform_indices = @transform_1, window_bounds = array<i64: 1, 16, 128>}, {transform_indices = @transform_2, window_bounds = array<i64: 1, 4, 128>}, {transform_indices = @transform_3, window_bounds = array<i64: 1, 16, 4, 128>}]} {
    %c0 = arith.constant 0 : index
    %c0_0 = arith.constant 0 : index
    %c0_1 = arith.constant 0 : index
    %c0_2 = arith.constant 0 : index
    %0 = vector.load %arg3[%c0, %c0_0, %c0_1, %c0_2] : memref<1x16x4x128xf32, #tpu.memory_space<vmem>>, vector<1x16x4x128xf32>
    %1 = vector.shape_cast %0 : vector<1x16x4x128xf32> to vector<16x4x128xf32>
    %c0_3 = arith.constant 0 : index
    %c0_4 = arith.constant 0 : index
    %c0_5 = arith.constant 0 : index
    %2 = vector.load %arg4[%c0_3, %c0_4, %c0_5] : memref<1x16x128xf32, #tpu.memory_space<vmem>>, vector<1x16x128xf32>
    %3 = vector.shape_cast %2 : vector<1x16x128xf32> to vector<16x128xf32>
    %c0_6 = arith.constant 0 : index
    %c0_7 = arith.constant 0 : index
    %c0_8 = arith.constant 0 : index
    %4 = vector.load %arg5[%c0_6, %c0_7, %c0_8] : memref<1x4x128xf32, #tpu.memory_space<vmem>>, vector<1x4x128xf32>
    %5 = vector.shape_cast %4 : vector<1x4x128xf32> to vector<4x128xf32>
    %6 = vector.shape_cast %3 : vector<16x128xf32> to vector<16x1x128xf32>
    %7 = vector.broadcast %6 : vector<16x1x128xf32> to vector<16x4x128xf32>
    %8 = arith.addf %1, %7 : vector<16x4x128xf32>
    %9 = vector.shape_cast %5 : vector<4x128xf32> to vector<1x4x128xf32>
    %10 = vector.broadcast %9 : vector<1x4x128xf32> to vector<16x4x128xf32>
    %11 = arith.addf %8, %10 : vector<16x4x128xf32>
    %c0_9 = arith.constant 0 : index
    %c0_10 = arith.constant 0 : index
    %c0_11 = arith.constant 0 : index
    %c0_12 = arith.constant 0 : index
    %12 = vector.load %arg6[%c0_9, %c0_10, %c0_11, %c0_12] : memref<1x16x4x128xf32, #tpu.memory_space<vmem>>, vector<1x16x4x128xf32>
    %13 = vector.shape_cast %12 : vector<1x16x4x128xf32> to vector<16x4x128xf32>
    %14 = vector.shape_cast %11 : vector<16x4x128xf32> to vector<1x16x4x128xf32>
    tpu.vector_store %arg6[%c0_9, %c0_10, %c0_11, %c0_12], %14 {strides = array<i32>} : memref<1x16x4x128xf32, #tpu.memory_space<vmem>>, vector<1x16x4x128xf32>,
    return
  }
  func.func @transform_0(%arg0: i32, %arg1: i32, %arg2: i32) -> (i32, i32, i32, i32) {
    %c0_i32 = arith.constant 0 : i32
    %c0_i32_0 = arith.constant 0 : i32
    return %arg0, %arg1, %arg2, %c0_i32 : i32, i32, i32, i32
  }
  func.func @transform_1(%arg0: i32, %arg1: i32, %arg2: i32) -> (i32, i32, i32) {
    %c0_i32 = arith.constant 0 : i32
    %c0_i32_0 = arith.constant 0 : i32
    return %arg0, %arg1, %c0_i32 : i32, i32, i32
  }
  func.func @transform_2(%arg0: i32, %arg1: i32, %arg2: i32) -> (i32, i32, i32) {
    %c0_i32 = arith.constant 0 : i32
    %c0_i32_0 = arith.constant 0 : i32
    return %arg0, %arg2, %c0_i32 : i32, i32, i32
  }
  func.func @transform_3(%arg0: i32, %arg1: i32, %arg2: i32) -> (i32, i32, i32, i32) {
    %c0_i32 = arith.constant 0 : i32
    %c0_i32_0 = arith.constant 0 : i32
    return %arg0, %arg1, %arg2, %c0_i32 : i32, i32, i32, i32
  }
}

</mosaic_0001>

<llo_original>
// kernel: tpu_custom_call.1
$region0: #{tpu_custom_call.1}
  #allocation0 [shape = 'u32[]', space=smem, size = 0x4, offset = 0x4, fixed_abs, tag = 'smem constant byte address 0x4 - core index']
  #allocation1 [shape = 'u32[144,128]{1,0:T(1,128)}', space=vmem, size = 0x12000, scoped, tag = 'internal scratch']
  %s0 = inlined_call_operand.hbm [shape: f32[2,16,4,128], index: 0, kind: input, shape index: {}, may-alias: {0,3}]
  %s1 = inlined_call_operand.vmem [shape: f32[2,16,128], index: 1, kind: input, shape index: {}]
  %s2 = inlined_call_operand.vmem [shape: f32[2,4,128], index: 2, kind: input, shape index: {}]
  %s3 = inlined_call_operand.hbm [shape: f32[2,16,4,128], index: 3, kind: output, shape index: {}, may-alias: {0,3}]
  %s4 = sld [smem:[#allocation0]]
  $region49: #{tpu_custom_call.1} parent=0
    _
  %s6 = ssub.s32 1, %s4
  %s7 = scalar_select 0, %s6, %s4
  $region1: #{tpu_custom_call.1} parent=0
    #allocation2 [shape = 'u8[65536]{0}', space=vmem, size = 0x10000, scoped, tag = 'input window, operand 0']
    #allocation3 [shape = 's32[2]{0}', space=sflag, size = 0x8, scoped, tag = 'scoped memory for tpu_custom_call.1']
    #allocation4 [shape = 's32[2]{0}', space=sflag, size = 0x8, scoped, tag = 'scoped memory for tpu_custom_call.1']
    #allocation5 [shape = 'u8[65536]{0}', space=vmem, size = 0x10000, scoped, tag = 'output window, operand 0']
    %8 = vsyncpa [#allocation3], 0
    %s9 = scalar_lea.sflag [#allocation3], 1
    %10 = vsyncpa %s9, 0
    %11 = vsyncpa [#allocation4], 0
    %s12 = scalar_lea.sflag [#allocation4], 1
    %13 = vsyncpa %s12, 0
    loop: start=0, step=1, limit=4
    $region2: #{tpu_custom_call.1} parent=1 // loop_pre_header
      _
    $region3: #{tpu_custom_call.1} parent=1 // loop_header
      %s15 = sphi 0, %s19
      %p16 = scmp.ge.s32.totalorder %s15, 4
      %s22 = sphi 0, %s41
      %s23 = sphi 0, %s37
      %s24 = sphi 0, %s33
      %s25 = sphi 0, %s22
      %s26 = sphi 0, %s23
      %s27 = sphi 0, %s24
      %s28 = sphi 0, %s25
      %s29 = sphi 0, %s26
      %s30 = sphi 0, %s27
      %s48 = sphi 0, %s50
      %s51 = sphi 0, %s48
      %s52 = sphi 0, %s51
      %s68 = sphi 0, %s52
      %s76 = sphi 0, %s78
      %s79 = sphi 0, %s76
      %s80 = sphi 0, %s79
      %s96 = sphi 0, %s80
      %s104 = sphi 0, %s106
      %s107 = sphi 0, %s104
      %s108 = sphi 0, %s107
      %s124 = sphi 0, %s108
      %s134 = sphi 0, %s136
      %s137 = sphi 0, %s134
      %s138 = sphi 0, %s137
      %s154 = sphi 0, %s138
    $region4: #{tpu_custom_call.1} parent=1 // loop_header_branch
      %18 = sbr.rel (%p16) target = $region8
    $region5: #{tpu_custom_call.1} parent=1 // loop_body
      %s20 = ssub.s32 %s15, 1
      %s21 = ssub.s32 %s15, 2
      %s31 = sadd.s32 1, %s24
      %p32 = scmp.ge.s32.totalorder %s31, 1
      %s33 = scalar_select %p32, 0, %s31
      %s34 = sadd.s32 1, %s23
      %s35 = scalar_select %p32, %s34, %s23
      %p36 = scmp.ge.s32.totalorder %s35, 1
      %s37 = scalar_select %p36, 0, %s35
      %s38 = sadd.s32 1, %s22
      %s39 = scalar_select %p36, %s38, %s22
      %p40 = scmp.ge.s32.totalorder %s39, 2
      %s41 = scalar_select %p40, 0, %s39
      %s42 = ssub.s32 %s22, %s41
      %s43 = ssub.s32 %s23, %s37
      %s44 = sor.u32 %s42, %s43
      %s45 = ssub.s32 %s24, %s33
      %s46 = sor.u32 %s44, %s45
      %p47 = scmp.eq.s32.totalorder %s46, 0
      %s49 = sadd.s32 %s48, 1
      %s50 = scalar_select %p47, %s48, %s49
      %p53 = pneg %p47
      %p54 = scmp.eq.s32.totalorder %s15, 1
      %p55 = por %p53, %p54
      %p56 = scmp.ne.s32.totalorder %s48, %s51
      %p57 = scmp.eq.s32.totalorder %s15, 0
      %p58 = por %p56, %p57
      %p59 = scmp.ne.s32.totalorder %s48, %s51
      %p60 = scmp.eq.s32.totalorder %s20, 1
      %p61 = por %p59, %p60
      %p62 = scmp.ne.s32.totalorder %s51, %s52
      %p63 = scmp.eq.s32.totalorder %s20, 0
      %p64 = por %p62, %p63
      %p65 = scmp.ne.s32.totalorder %s51, %s52
      %p66 = scmp.eq.s32.totalorder %s21, 1
      %p67 = por %p65, %p66
      %p69 = scmp.ne.s32.totalorder %s52, %s68
      %p70 = scmp.eq.s32.totalorder %s21, 0
      %p71 = por %p69, %p70
      %s72 = ssub.s32 %s22, %s41
      %s73 = ssub.s32 %s23, %s37
      %s74 = sor.u32 %s72, %s73
      %p75 = scmp.eq.s32.totalorder %s74, 0
      %s77 = sadd.s32 %s76, 1
      %s78 = scalar_select %p75, %s76, %s77
      %p81 = pneg %p75
      %p82 = scmp.eq.s32.totalorder %s15, 1
      %p83 = por %p81, %p82
      %p84 = scmp.ne.s32.totalorder %s76, %s79
      %p85 = scmp.eq.s32.totalorder %s15, 0
      %p86 = por %p84, %p85
      %p87 = scmp.ne.s32.totalorder %s76, %s79
      %p88 = scmp.eq.s32.totalorder %s20, 1
      %p89 = por %p87, %p88
      %p90 = scmp.ne.s32.totalorder %s79, %s80
      %p91 = scmp.eq.s32.totalorder %s20, 0
      %p92 = por %p90, %p91
      %p93 = scmp.ne.s32.totalorder %s79, %s80
      %p94 = scmp.eq.s32.totalorder %s21, 1
      %p95 = por %p93, %p94
      %p97 = scmp.ne.s32.totalorder %s80, %s96
      %p98 = scmp.eq.s32.totalorder %s21, 0
      %p99 = por %p97, %p98
      %s100 = ssub.s32 %s22, %s41
      %s101 = ssub.s32 %s24, %s33
      %s102 = sor.u32 %s100, %s101
      %p103 = scmp.eq.s32.totalorder %s102, 0
      %s105 = sadd.s32 %s104, 1
      %s106 = scalar_select %p103, %s104, %s105
      %p109 = pneg %p103
      %p110 = scmp.eq.s32.totalorder %s15, 1
      %p111 = por %p109, %p110
      %p112 = scmp.ne.s32.totalorder %s104, %s107
      %p113 = scmp.eq.s32.totalorder %s15, 0
      %p114 = por %p112, %p113
      %p115 = scmp.ne.s32.totalorder %s104, %s107
      %p116 = scmp.eq.s32.totalorder %s20, 1
      %p117 = por %p115, %p116
      %p118 = scmp.ne.s32.totalorder %s107, %s108
      %p119 = scmp.eq.s32.totalorder %s20, 0
      %p120 = por %p118, %p119
      %p121 = scmp.ne.s32.totalorder %s107, %s108
      %p122 = scmp.eq.s32.totalorder %s21, 1
      %p123 = por %p121, %p122
      %p125 = scmp.ne.s32.totalorder %s108, %s124
      %p126 = scmp.eq.s32.totalorder %s21, 0
      %p127 = por %p125, %p126
      %s128 = ssub.s32 %s22, %s41
      %s129 = ssub.s32 %s23, %s37
      %s130 = sor.u32 %s128, %s129
      %s131 = ssub.s32 %s24, %s33
      %s132 = sor.u32 %s130, %s131
      %p133 = scmp.eq.s32.totalorder %s132, 0
      %s135 = sadd.s32 %s134, 1
      %s136 = scalar_select %p133, %s134, %s135
      %p139 = pneg %p133
      %p140 = scmp.eq.s32.totalorder %s15, 1
      %p141 = por %p139, %p140
      %p142 = scmp.ne.s32.totalorder %s134, %s137
      %p143 = scmp.eq.s32.totalorder %s15, 0
      %p144 = por %p142, %p143
      %p145 = scmp.ne.s32.totalorder %s134, %s137
      %p146 = scmp.eq.s32.totalorder %s20, 1
      %p147 = por %p145, %p146
      %p148 = scmp.ne.s32.totalorder %s137, %s138
      %p149 = scmp.eq.s32.totalorder %s20, 0
      %p150 = por %p148, %p149
      %p151 = scmp.ne.s32.totalorder %s137, %s138
      %p152 = scmp.eq.s32.totalorder %s21, 1
      %p153 = por %p151, %p152
      %p155 = scmp.ne.s32.totalorder %s138, %s154
      %p156 = scmp.eq.s32.totalorder %s21, 0
      %p157 = por %p155, %p156
      %p158 = scmp.le.s32.totalorder 1, %s15
      %p159 = scmp.lt.s32.totalorder %s15, 3
      %p160 = pnand %p158, %p159
      %p161 = pneg %p160
      // Predicated region
      $region9: #{tpu_custom_call.1} parent=5 // pred_check
        _
      $region10: #{tpu_custom_call.1} parent=5 // pred_check_branch
        %163 = sbr.rel (%p160) target = $region12
      $region11: #{tpu_custom_call.1} parent=5 // pred_region
        %s164 = ssub.s32 %s15, 1
      $region12: #{tpu_custom_call.1} parent=5 // pred_fallthru
        _
      %p165 = scmp.lt.s32.totalorder %s15, 2
      // Predicated region
      $region13: #{tpu_custom_call.1} parent=5 // pred_check
        %p166 = pneg %p165
      $region14: #{tpu_custom_call.1} parent=5 // pred_check_branch
        %168 = sbr.rel (%p166) target = $region16
      $region15: #{tpu_custom_call.1} parent=5 // pred_region
        // Predicated region
        $region17: #{tpu_custom_call.1} parent=15 // pred_check
          %p169 = pneg %p58
        $region18: #{tpu_custom_call.1} parent=15 // pred_check_branch
          %171 = sbr.rel (%p169) target = $region20
        $region19: #{tpu_custom_call.1} parent=15 // pred_region
          %s172 = sand.u32 %s48, 1
          %s173 = scalar_lea.sflag [#allocation3], %s172
          %s174 = sand.u32 %s48, 1
          %s175 = smul.addr %s174, 64
          %s176 = scalar_lea.vmem [#allocation2], %s175
          %s177 = smul.u32 16, %s23
          %s179 = ssub.s32 1024, 1024
          %180 = vsyncadd %s173, %s179
          %s181 = sadd.s32 %s24, %s177
          %s182 = smul.addr %s22, 16
          %s183 = sadd.s32 %s181, %s182
          %s184 = smul.addr %s183, 64
          %s185 = scalar_lea.hbm %s0, %s184
          %s186 = sshll.u32 %s176, 4
          %s187 = int_to_ptr.vmem [resolvable:$true] %s186
          %192 = dma.hbm_to_vmem [thread:$0]  %s185, 1024, %s187, %s173, 64, 64, 4
        $region20: #{tpu_custom_call.1} parent=15 // pred_fallthru
          _
        // Predicated region
        $region21: #{tpu_custom_call.1} parent=15 // pred_check
          %p193 = pneg %p86
        $region22: #{tpu_custom_call.1} parent=15 // pred_check_branch
          %195 = sbr.rel (%p193) target = $region24
        $region23: #{tpu_custom_call.1} parent=15 // pred_region
          %s196 = smul.u32 2, %s23
          %p197 = scmp.lt.s32.totalorder %s22, 1
          %s198 = scalar_select %p197, %s22, 1
          %p199 = scmp.lt.s32.totalorder %s196, 1
          %s200 = scalar_select %p199, %s196, 1
          %s201 = smul.addr %s198, 2
          %s202 = sadd.s32 %s200, %s201
          %s203 = smul.addr %s202, 8
          %s204 = scalar_lea.vmem %s1, %s203
          %s205 = smul.u32 2, %s23
        $region24: #{tpu_custom_call.1} parent=15 // pred_fallthru
          _
        // Predicated region
        $region25: #{tpu_custom_call.1} parent=15 // pred_check
          %p206 = pneg %p114
        $region26: #{tpu_custom_call.1} parent=15 // pred_check_branch
          %208 = sbr.rel (%p206) target = $region28
        $region27: #{tpu_custom_call.1} parent=15 // pred_region
          %p209 = scmp.lt.s32.totalorder %s22, 1
          %s210 = scalar_select %p209, %s22, 1
          %p211 = scmp.lt.s32.totalorder %s24, 0
          %s212 = scalar_select %p211, %s24, 0
          %s213 = sadd.s32 %s212, %s210
          %s214 = smul.addr %s213, 4
          %s215 = scalar_lea.vmem %s2, %s214
        $region28: #{tpu_custom_call.1} parent=15 // pred_fallthru
          _
      $region16: #{tpu_custom_call.1} parent=5 // pred_fallthru
        _
      %p216 = scmp.le.s32.totalorder 1, %s15
      %p217 = scmp.lt.s32.totalorder %s15, 3
      %p218 = pnand %p216, %p217
      %p219 = pneg %p218
      // Predicated region
      $region29: #{tpu_custom_call.1} parent=5 // pred_check
        _
      $region30: #{tpu_custom_call.1} parent=5 // pred_check_branch
        %221 = sbr.rel (%p218) target = $region32
      $region31: #{tpu_custom_call.1} parent=5 // pred_region
        %s222 = ssub.s32 %s15, 1
        %s223 = sand.u32 %s51, 1
        %s224 = scalar_lea.sflag [#allocation3], %s223
        %s225 = sand.u32 %s51, 1
        %s226 = smul.addr %s225, 64
        %s227 = scalar_lea.vmem [#allocation2], %s226
        // Predicated region
        $region33: #{tpu_custom_call.1} parent=31 // pred_check
          %p228 = pneg %p64
        $region34: #{tpu_custom_call.1} parent=31 // pred_check_branch
          %230 = sbr.rel (%p228) target = $region36
        $region35: #{tpu_custom_call.1} parent=31 // pred_region
          %231 = dma.done %s224, 1024
        $region36: #{tpu_custom_call.1} parent=31 // pred_fallthru
          _
        %s232 = sand.u32 %s51, 1
        %s233 = scalar_lea.sflag [#allocation3], %s232
        %s234 = sand.u32 %s51, 1
        %s235 = smul.addr %s234, 64
        %s236 = scalar_lea.vmem [#allocation2], %s235
        %p237 = pneg %p64
        %p238 = pneg %p61
        %s239 = smul.u32 2, %s26
        %p240 = scmp.lt.s32.totalorder %s25, 1
        %s241 = scalar_select %p240, %s25, 1
        %p242 = scmp.lt.s32.totalorder %s239, 1
        %s243 = scalar_select %p242, %s239, 1
        %s244 = smul.addr %s241, 2
        %s245 = sadd.s32 %s243, %s244
        %s246 = smul.addr %s245, 8
        %s247 = scalar_lea.vmem %s1, %s246
        %p248 = pneg %p92
        %p249 = pneg %p89
        %p250 = scmp.lt.s32.totalorder %s25, 1
        %s251 = scalar_select %p250, %s25, 1
        %p252 = scmp.lt.s32.totalorder %s27, 0
        %s253 = scalar_select %p252, %s27, 0
        %s254 = sadd.s32 %s253, %s251
        %s255 = smul.addr %s254, 4
        %s256 = scalar_lea.vmem %s2, %s255
        %p257 = pneg %p120
        %p258 = pneg %p117
        %p259 = pneg %p150
        %p260 = pneg %p147
        %s261 = sand.u32 %s137, 1
        %s262 = scalar_lea.sflag [#allocation4], %s261
        %s263 = sand.u32 %s137, 1
        %s264 = smul.addr %s263, 64
        %s265 = scalar_lea.vmem [#allocation5], %s264
        %s266 = smul.u32 16, %s26
        %s267 = smul.u32 2, %s26
        %p268 = scmp.lt.s32.totalorder %s25, 1
        %s269 = scalar_select %p268, %s25, 1
        %p270 = scmp.lt.s32.totalorder %s267, 1
        %s271 = scalar_select %p270, %s267, 1
        %s272 = smul.addr %s269, 2
        %s273 = sadd.s32 %s271, %s272
        %s274 = smul.addr %s273, 8
        %s275 = scalar_lea.vmem %s1, %s274
        %s276 = smul.u32 2, %s26
        %p277 = scmp.lt.s32.totalorder %s25, 1
        %s278 = scalar_select %p277, %s25, 1
        %p279 = scmp.lt.s32.totalorder %s27, 0
        %s280 = scalar_select %p279, %s27, 0
        %s281 = sadd.s32 %s280, %s278
        %s282 = smul.addr %s281, 4
        %s283 = scalar_lea.vmem %s2, %s282
        %s284 = smul.u32 16, %s26
        %v285 = vld [vmem:[%s227] sm:$0xf]
        %v286 = vld [vmem:[%s227 + $0x4] sm:$0xf]
        %v287 = vld [vmem:[%s227 + $0x8] sm:$0xf]
        %v288 = vld [vmem:[%s227 + $0xc] sm:$0xf]
        %v289 = vld [vmem:[%s227 + $0x10] sm:$0xf]
        %v290 = vld [vmem:[%s227 + $0x14] sm:$0xf]
        %v291 = vld [vmem:[%s227 + $0x18] sm:$0xf]
        %v292 = vld [vmem:[%s227 + $0x1c] sm:$0xf]
        %v293 = vld [vmem:[%s227 + $0x20] sm:$0xf]
        %v294 = vld [vmem:[%s227 + $0x24] sm:$0xf]
        %v295 = vld [vmem:[%s227 + $0x28] sm:$0xf]
        %v296 = vld [vmem:[%s227 + $0x2c] sm:$0xf]
        %v297 = vld [vmem:[%s227 + $0x30] sm:$0xf]
        %v298 = vld [vmem:[%s227 + $0x34] sm:$0xf]
        %v299 = vld [vmem:[%s227 + $0x38] sm:$0xf]
        %v300 = vld [vmem:[%s227 + $0x3c] sm:$0xf]
        %v301 = vld [vmem:[%s275] sm:$0xff]
        %v302 = vld [vmem:[%s275 + $0x8] sm:$0xff]
        %v303 = vld [vmem:[%s283] sm:$0xf]
        %v306 = vcombine.high %v301, %v301
        %v308 = vunpack.c.l.s4 1966171168
        %v309 = vunpack.c.0.s8 %v308
        %v310 = vlaneseq
        %v311 = vshrl.u32 %v310, 7
        %v312 = vsub.s32 %v309, %v311
        %v313 = vrot.slane %v301, %v312
        %v315 = vunpack.c.l.s4 1966171168
        %v316 = vunpack.c.0.s8 %v315
        %v317 = vlaneseq
        %v318 = vshrl.u32 %v317, 7
        %v319 = vsub.s32 %v316, %v318
        %v320 = vrot.slane %v306, %v319
        %v321 = vcombine.high %v313, %v313
        %v322 = vcombine.high %v320, %v320
        %v324 = vunpack.c.l.s4 1966171168
        %v325 = vunpack.c.0.s8 %v324
        %v326 = vlaneseq
        %v327 = vshrl.u32 %v326, 7
        %v328 = vsub.s32 %v325, %v327
        %v329 = vrot.slane %v313, %v328
        %v331 = vunpack.c.l.s4 1966171168
        %v332 = vunpack.c.0.s8 %v331
        %v333 = vlaneseq
        %v334 = vshrl.u32 %v333, 7
        %v335 = vsub.s32 %v332, %v334
        %v336 = vrot.slane %v320, %v335
        %v338 = vunpack.c.l.s4 1966171168
        %v339 = vunpack.c.0.s8 %v338
        %v340 = vlaneseq
        %v341 = vshrl.u32 %v340, 7
        %v342 = vsub.s32 %v339, %v341
        %v343 = vrot.slane %v321, %v342
        %v345 = vunpack.c.l.s4 1966171168
        %v346 = vunpack.c.0.s8 %v345
        %v347 = vlaneseq
        %v348 = vshrl.u32 %v347, 7
        %v349 = vsub.s32 %v346, %v348
        %v350 = vrot.slane %v322, %v349
        %v351 = vcombine.high %v329, %v329
        %v352 = vcombine.high %v336, %v336
        %v353 = vcombine.high %v343, %v343
        %v354 = vcombine.high %v350, %v350
        %v355 = vcombine.high %v302, %v302
        %v357 = vunpack.c.l.s4 1966171168
        %v358 = vunpack.c.0.s8 %v357
        %v359 = vlaneseq
        %v360 = vshrl.u32 %v359, 7
        %v361 = vsub.s32 %v358, %v360
        %v362 = vrot.slane %v302, %v361
        %v364 = vunpack.c.l.s4 1966171168
        %v365 = vunpack.c.0.s8 %v364
        %v366 = vlaneseq
        %v367 = vshrl.u32 %v366, 7
        %v368 = vsub.s32 %v365, %v367
        %v369 = vrot.slane %v355, %v368
        %v370 = vcombine.high %v362, %v362
        %v371 = vcombine.high %v369, %v369
        %v373 = vunpack.c.l.s4 1966171168
        %v374 = vunpack.c.0.s8 %v373
        %v375 = vlaneseq
        %v376 = vshrl.u32 %v375, 7
        %v377 = vsub.s32 %v374, %v376
        %v378 = vrot.slane %v362, %v377
        %v380 = vunpack.c.l.s4 1966171168
        %v381 = vunpack.c.0.s8 %v380
        %v382 = vlaneseq
        %v383 = vshrl.u32 %v382, 7
        %v384 = vsub.s32 %v381, %v383
        %v385 = vrot.slane %v369, %v384
        %v387 = vunpack.c.l.s4 1966171168
        %v388 = vunpack.c.0.s8 %v387
        %v389 = vlaneseq
        %v390 = vshrl.u32 %v389, 7
        %v391 = vsub.s32 %v388, %v390
        %v392 = vrot.slane %v370, %v391
        %v394 = vunpack.c.l.s4 1966171168
        %v395 = vunpack.c.0.s8 %v394
        %v396 = vlaneseq
        %v397 = vshrl.u32 %v396, 7
        %v398 = vsub.s32 %v395, %v397
        %v399 = vrot.slane %v371, %v398
        %v400 = vcombine.high %v378, %v378
        %v401 = vcombine.high %v385, %v385
        %v402 = vcombine.high %v392, %v392
        %v403 = vcombine.high %v399, %v399
        %v404 = vlaneseq
        %v405 = vshrl.u32 %v404, 7
        %v406 = vsub.s32 0, %v405
        %v407 = vrot.slane %v329, %v406
        %v408 = vlaneseq
        %v409 = vshrl.u32 %v408, 7
        %v410 = vsub.s32 0, %v409
        %v411 = vrot.slane %v343, %v410
        %v412 = vlaneseq
        %v413 = vshrl.u32 %v412, 7
        %v414 = vsub.s32 0, %v413
        %v415 = vrot.slane %v351, %v414
        %v416 = vlaneseq
        %v417 = vshrl.u32 %v416, 7
        %v418 = vsub.s32 0, %v417
        %v419 = vrot.slane %v353, %v418
        %v420 = vlaneseq
        %v421 = vshrl.u32 %v420, 7
        %v422 = vsub.s32 0, %v421
        %v423 = vrot.slane %v336, %v422
        %v424 = vlaneseq
        %v425 = vshrl.u32 %v424, 7
        %v426 = vsub.s32 0, %v425
        %v427 = vrot.slane %v350, %v426
        %v428 = vlaneseq
        %v429 = vshrl.u32 %v428, 7
        %v430 = vsub.s32 0, %v429
        %v431 = vrot.slane %v352, %v430
        %v432 = vlaneseq
        %v433 = vshrl.u32 %v432, 7
        %v434 = vsub.s32 0, %v433
        %v435 = vrot.slane %v354, %v434
        %v436 = vlaneseq
        %v437 = vshrl.u32 %v436, 7
        %v438 = vsub.s32 0, %v437
        %v439 = vrot.slane %v378, %v438
        %v440 = vlaneseq
        %v441 = vshrl.u32 %v440, 7
        %v442 = vsub.s32 0, %v441
        %v443 = vrot.slane %v392, %v442
        %v444 = vlaneseq
        %v445 = vshrl.u32 %v444, 7
        %v446 = vsub.s32 0, %v445
        %v447 = vrot.slane %v400, %v446
        %v448 = vlaneseq
        %v449 = vshrl.u32 %v448, 7
        %v450 = vsub.s32 0, %v449
        %v451 = vrot.slane %v402, %v450
        %v452 = vlaneseq
        %v453 = vshrl.u32 %v452, 7
        %v454 = vsub.s32 0, %v453
        %v455 = vrot.slane %v385, %v454
        %v456 = vlaneseq
        %v457 = vshrl.u32 %v456, 7
        %v458 = vsub.s32 0, %v457
        %v459 = vrot.slane %v399, %v458
        %v460 = vlaneseq
        %v461 = vshrl.u32 %v460, 7
        %v462 = vsub.s32 0, %v461
        %v463 = vrot.slane %v401, %v462
        %v464 = vlaneseq
        %v465 = vshrl.u32 %v464, 7
        %v466 = vsub.s32 0, %v465
        %v467 = vrot.slane %v403, %v466
        %v484 = vadd.f32 %v285, %v407
        %v485 = vadd.f32 %v286, %v411
        %v486 = vadd.f32 %v287, %v415
        %v487 = vadd.f32 %v288, %v419
        %v488 = vadd.f32 %v289, %v423
        %v489 = vadd.f32 %v290, %v427
        %v490 = vadd.f32 %v291, %v431
        %v491 = vadd.f32 %v292, %v435
        %v492 = vadd.f32 %v293, %v439
        %v493 = vadd.f32 %v294, %v443
        %v494 = vadd.f32 %v295, %v447
        %v495 = vadd.f32 %v296, %v451
        %v496 = vadd.f32 %v297, %v455
        %v497 = vadd.f32 %v298, %v459
        %v498 = vadd.f32 %v299, %v463
        %v499 = vadd.f32 %v300, %v467
        %v500 = vadd.f32 %v484, %v303
        %v501 = vadd.f32 %v485, %v303
        %v502 = vadd.f32 %v486, %v303
        %v503 = vadd.f32 %v487, %v303
        %v504 = vadd.f32 %v488, %v303
        %v505 = vadd.f32 %v489, %v303
        %v506 = vadd.f32 %v490, %v303
        %v507 = vadd.f32 %v491, %v303
        %v508 = vadd.f32 %v492, %v303
        %v509 = vadd.f32 %v493, %v303
        %v510 = vadd.f32 %v494, %v303
        %v511 = vadd.f32 %v495, %v303
        %v512 = vadd.f32 %v496, %v303
        %v513 = vadd.f32 %v497, %v303
        %v514 = vadd.f32 %v498, %v303
        %v515 = vadd.f32 %v499, %v303
        %516 = vst [vmem:[%s265] sm:$0xf] %v500
        %517 = vst [vmem:[%s265 + $0x4] sm:$0xf] %v501
        %518 = vst [vmem:[%s265 + $0x8] sm:$0xf] %v502
        %519 = vst [vmem:[%s265 + $0xc] sm:$0xf] %v503
        %520 = vst [vmem:[%s265 + $0x10] sm:$0xf] %v504
        %521 = vst [vmem:[%s265 + $0x14] sm:$0xf] %v505
        %522 = vst [vmem:[%s265 + $0x18] sm:$0xf] %v506
        %523 = vst [vmem:[%s265 + $0x1c] sm:$0xf] %v507
        %524 = vst [vmem:[%s265 + $0x20] sm:$0xf] %v508
        %525 = vst [vmem:[%s265 + $0x24] sm:$0xf] %v509
        %526 = vst [vmem:[%s265 + $0x28] sm:$0xf] %v510
        %527 = vst [vmem:[%s265 + $0x2c] sm:$0xf] %v511
        %528 = vst [vmem:[%s265 + $0x30] sm:$0xf] %v512
        %529 = vst [vmem:[%s265 + $0x34] sm:$0xf] %v513
        %530 = vst [vmem:[%s265 + $0x38] sm:$0xf] %v514
        %531 = vst [vmem:[%s265 + $0x3c] sm:$0xf] %v515
        %s532 = sand.u32 %s137, 1
        %s533 = scalar_lea.sflag [#allocation4], %s532
        %s534 = sand.u32 %s137, 1
        %s535 = smul.addr %s534, 64
        %s536 = scalar_lea.vmem [#allocation5], %s535
        // Predicated region
        $region37: #{tpu_custom_call.1} parent=31 // pred_check
          %p537 = pneg %p147
        $region38: #{tpu_custom_call.1} parent=31 // pred_check_branch
          %539 = sbr.rel (%p537) target = $region40
        $region39: #{tpu_custom_call.1} parent=31 // pred_region
          %s540 = smul.u32 16, %s26
          %s542 = ssub.s32 1024, 1024
          %543 = vsyncadd %s533, %s542
          %s544 = sadd.s32 %s27, %s540
          %s545 = smul.addr %s25, 16
          %s546 = sadd.s32 %s544, %s545
          %s547 = smul.addr %s546, 64
          %s548 = scalar_lea.hbm %s3, %s547
          %s549 = sshll.u32 %s536, 4
          %s550 = int_to_ptr.vmem [resolvable:$true] %s549
          %555 = dma.vmem_to_hbm [thread:$0]  %s550, 1024, %s548, %s533, 64, 64, 4
        $region40: #{tpu_custom_call.1} parent=31 // pred_fallthru
          _
      $region32: #{tpu_custom_call.1} parent=5 // pred_fallthru
        _
      %p556 = scmp.le.s32.totalorder 2, %s15
      // Predicated region
      $region41: #{tpu_custom_call.1} parent=5 // pred_check
        %p557 = pneg %p556
      $region42: #{tpu_custom_call.1} parent=5 // pred_check_branch
        %559 = sbr.rel (%p557) target = $region44
      $region43: #{tpu_custom_call.1} parent=5 // pred_region
        %s560 = ssub.s32 %s15, 2
        // Predicated region
        $region45: #{tpu_custom_call.1} parent=43 // pred_check
          %p561 = pneg %p153
        $region46: #{tpu_custom_call.1} parent=43 // pred_check_branch
          %563 = sbr.rel (%p561) target = $region48
        $region47: #{tpu_custom_call.1} parent=43 // pred_region
          %s564 = sand.u32 %s138, 1
          %s565 = scalar_lea.sflag [#allocation4], %s564
          %s566 = sand.u32 %s138, 1
          %s567 = smul.addr %s566, 64
          %s568 = scalar_lea.vmem [#allocation5], %s567
          %569 = dma.done %s565, 1024
        $region48: #{tpu_custom_call.1} parent=43 // pred_fallthru
          _
      $region44: #{tpu_custom_call.1} parent=5 // pred_fallthru
        _
    $region6: #{tpu_custom_call.1} parent=1 // loop_footer
      %s19 = sadd.s32 1, %s15
    $region7: #{tpu_custom_call.1} parent=1 // loop_footer_branch
      %14 = sbr.rel target = $region3
    $region8: #{tpu_custom_call.1} parent=1 // loop_exit
      _
    %570 = vsyncpa [#allocation3], 1
    %s571 = scalar_lea.sflag [#allocation3], 1
    %572 = vsyncpa %s571, 1
    %573 = vsyncpa [#allocation4], 1
    %s574 = scalar_lea.sflag [#allocation4], 1
    %575 = vsyncpa %s574, 1

</llo_original>
